<compile_context>
chip_gen: v5e
topology: v5e:2x2
jax: 0.10.0
libtpu: 0.0.40
codegen_flags: <defaults>
</compile_context>

<pallas_src>
import jax
import jax.numpy as jnp
from jax import lax
from jax.experimental import pallas as pl
from jax.experimental.pallas import tpu as pltpu


def _rsr_partial_kernel(z_ref, a_ref, id_ref, ss_ref, t2_ref):
    """Processes one (TILE_N, D) tile of z for the current chunk.

    ss_ref: (8, D)   resident accumulator of sum((z - A^T A z)^2) for this chunk.
    t2_ref: (8, 128) per-chunk ||A A^T - I||_F^2 (broadcast; written once).
    """
    i = pl.program_id(1)
    tile_n, D = z_ref.shape

    z = z_ref[...]                      # (TILE_N, D) f32
    A = a_ref[...]                      # (d, D) f32

    # z_hat[n] = A @ z[n]  ==  z @ A^T : contract the shared D axis directly on
    # the MXU (no materialized transpose through the XLU).
    z_hat = lax.dot_general(z, A, (((1,), (1,)), ((), ())),
                            preferred_element_type=jnp.float32)   # (TILE_N, d)
    # AtAz[n] = A^T @ z_hat[n]  ==  z_hat @ A
    AtAz = jnp.dot(z_hat, A, preferred_element_type=jnp.float32)  # (TILE_N, D)

    diff = z - AtAz
    sq = diff * diff
    # Fold the TILE_N rows down to the 8-sublane accumulator shape: summing over
    # the leading (major) axis is just elementwise vreg adds (VPU, no XLU).
    part = jnp.sum(sq.reshape(tile_n // 8, 8, D), axis=0)          # (8, D)

    @pl.when(i == 0)
    def _init():
        ss_ref[...] = jnp.zeros_like(ss_ref)

    ss_ref[...] += part

    # term2 does not depend on N: compute it once per chunk, in the epilogue.
    @pl.when(i == pl.num_programs(1) - 1)
    def _finalize():
        G = lax.dot_general(A, A, (((1,), (1,)), ((), ())),
                            preferred_element_type=jnp.float32)    # (d, d) = A A^T
        R = G - id_ref[...]
        term2 = jnp.sum(R * R)
        t2_ref[...] = jnp.full(t2_ref.shape, term2, dtype=jnp.float32)


def _round_up(x, m):
    return ((x + m - 1) // m) * m


def _pick_tile_n(N, D, vmem_budget_bytes=8 * 1024 * 1024):
    # Per z-tile row we keep roughly 5 f32 copies live in VMEM (double-buffered
    # z tile + z_hat/AtAz/diff intermediates). Keep the tile well inside the
    # scoped-VMEM limit on every TPU generation (v7x: 64 MiB physical).
    bytes_per_row = 5 * D * 4
    t = max(8, min(512, (vmem_budget_bytes // bytes_per_row) // 8 * 8))
    return int(min(t, _round_up(max(N, 1), 8)))


def rsr_loss(z, A, Id, lambda1, lambda2, *, tile_n=None, num_chunks=2):
    """Pallas-TPU RSRLoss forward: lambda1*||z - A^T A z||_F + lambda2*||A A^T - I||_F^2."""
    z = jnp.asarray(z, jnp.float32)
    A = jnp.asarray(A, jnp.float32)
    Id = jnp.asarray(Id, jnp.float32)

    N, D = z.shape
    d, D2 = A.shape
    assert D == D2 and Id.shape == (d, d)

    if tile_n is None:
        tile_n = _pick_tile_n(N, D)
    chunk_rows = num_chunks * tile_n
    n_pad = _round_up(N, chunk_rows)
    if n_pad != N:
        # Zero rows give z - A^T A z = 0, so padding does not change the loss.
        z = jnp.pad(z, ((0, n_pad - N), (0, 0)))
    tiles_per_chunk = n_pad // chunk_rows

    grid = (num_chunks, tiles_per_chunk)

    ss_parts, t2 = pl.pallas_call(
        _rsr_partial_kernel,
        out_shape=(
            jax.ShapeDtypeStruct((num_chunks * 8, D), jnp.float32),    # SS partials
            jax.ShapeDtypeStruct((num_chunks * 8, 128), jnp.float32),  # term2 per chunk
        ),
        grid_spec=pltpu.PrefetchScalarGridSpec(
            num_scalar_prefetch=0,
            grid=grid,
            in_specs=[
                # z: streamed, double-buffered tiles; chunk c owns rows
                # [c*tiles_per_chunk*tile_n, (c+1)*tiles_per_chunk*tile_n).
                pl.BlockSpec((tile_n, D),
                             lambda c, i, T=tiles_per_chunk: (c * T + i, 0)),
                # A, Id: full blocks, resident across the whole grid.
                pl.BlockSpec((d, D), lambda c, i: (0, 0)),
                pl.BlockSpec((d, d), lambda c, i: (0, 0)),
            ],
            out_specs=[
                # Block index depends only on c -> resident accumulator across
                # the (arbitrary) reduction axis, one block per parallel chunk.
                pl.BlockSpec((8, D), lambda c, i: (c, 0)),
                pl.BlockSpec((8, 128), lambda c, i: (c, 0)),
            ],
        ),
        compiler_params=pltpu.CompilerParams(
            dimension_semantics=("parallel", "arbitrary"),
            vmem_limit_bytes=32 * 1024 * 1024,
        ),
    )(z, A, Id)

    # Single cross-lane reduce + sqrt + lambda combine (tiny, traced epilogue).
    term1 = jnp.sqrt(jnp.sum(ss_parts))
    term2 = t2[0, 0]
    return lambda1 * term1 + lambda2 * term2


def rsr_loss_ref(z, A, Id, lambda1, lambda2):
    """Pure-JAX reference mirroring the PyTorch forward."""
    z_hat = jnp.einsum("dk,nk->nd", A, z)
    AtAz = jnp.einsum("dk,nd->nk", A, z_hat)
    term1 = jnp.sqrt(jnp.sum((z - AtAz) ** 2))
    term2 = jnp.sum((A @ A.T - Id) ** 2)
    return lambda1 * term1 + lambda2 * term2


if __name__ == "__main__":
    # Small, deterministic problem: batch N=8, ambient dim D=32, subspace dim d=16.
    lambda1, lambda2 = 1.0, 0.5
    N, D, d = 8, 32, 16

    key = jax.random.PRNGKey(0)
    kz, ka = jax.random.split(key)
    z = jax.random.normal(kz, (N, D), dtype=jnp.float32)
    A = jax.random.normal(ka, (d, D), dtype=jnp.float32) / jnp.sqrt(D)
    Id = jnp.eye(d, dtype=jnp.float32)  # the registered buffer

    loss = jax.jit(rsr_loss)(z, A, Id, lambda1, lambda2)
    loss = jax.block_until_ready(loss)

    ref = rsr_loss_ref(z, A, Id, lambda1, lambda2)
    assert jnp.allclose(loss, ref, rtol=1e-4, atol=1e-4), (loss, ref)

    print("KERNEL_OK")
</pallas_src>

<mosaic_0001>
module attributes {stable_mosaic.version = 11 : i64} {
  func.func @_rsr_partial_kernel(%arg0: i32, %arg1: i32, %arg2: memref<8x32xf32, #tpu.memory_space<vmem>>, %arg3: memref<16x32xf32, #tpu.memory_space<vmem>>, %arg4: memref<16x16xf32, #tpu.memory_space<vmem>>, %arg5: memref<8x32xf32, #tpu.memory_space<vmem>>, %arg6: memref<8x128xf32, #tpu.memory_space<vmem>>) attributes {dimension_semantics = [#tpu.dimension_semantics<parallel>, #tpu.dimension_semantics<arbitrary>], iteration_bounds = array<i64: 2, 1>, scalar_prefetch = 0 : i64, scratch_operands = 0 : i64, tpu.core_type = #tpu.core_type<tc>, window_params = [{transform_indices = @transform_0, window_bounds = array<i64: 8, 32>}, {pipeline_mode = #tpu.pipeline_mode<synchronous>, transform_indices = @transform_1, window_bounds = array<i64: 16, 32>}, {pipeline_mode = #tpu.pipeline_mode<synchronous>, transform_indices = @transform_2, window_bounds = array<i64: 16, 16>}, {transform_indices = @transform_3, window_bounds = array<i64: 8, 32>}, {transform_indices = @transform_4, window_bounds = array<i64: 8, 128>}]} {
    %c0 = arith.constant 0 : index
    %c0_0 = arith.constant 0 : index
    %0 = vector.load %arg2[%c0, %c0_0] : memref<8x32xf32, #tpu.memory_space<vmem>>, vector<8x32xf32>
    %c0_1 = arith.constant 0 : index
    %c0_2 = arith.constant 0 : index
    %1 = vector.load %arg3[%c0_1, %c0_2] : memref<16x32xf32, #tpu.memory_space<vmem>>, vector<16x32xf32>
    %cst = arith.constant dense<0.000000e+00> : vector<8x16xf32>
    %2 = tpu.matmul %0, %1, %cst {dimension_numbers = #tpu.dot_dimension_numbers<[1], [1], [0], [0], [0, 0, 1, 0], [], []>} : vector<8x32xf32>, vector<16x32xf32>, vector<8x16xf32> -> vector<8x16xf32>
    %cst_3 = arith.constant dense<0.000000e+00> : vector<8x32xf32>
    %3 = tpu.matmul %2, %1, %cst_3 {dimension_numbers = #tpu.dot_dimension_numbers<[1], [0], [0], [1], [0, 0, 1, 1], [], []>} : vector<8x16xf32>, vector<16x32xf32>, vector<8x32xf32> -> vector<8x32xf32>
    %4 = arith.subf %0, %3 : vector<8x32xf32>
    %5 = arith.mulf %4, %4 : vector<8x32xf32>
    %6 = vector.shape_cast %5 : vector<8x32xf32> to vector<1x8x32xf32>
    %cst_4 = arith.constant dense<0.000000e+00> : vector<8x32xf32>
    %7 = vector.multi_reduction <add>, %6, %cst_4 [0] : vector<1x8x32xf32> to vector<8x32xf32>
    %c0_i32 = arith.constant 0 : i32
    %8 = arith.cmpi eq, %arg1, %c0_i32 : i32
    %9 = arith.extui %8 : i1 to i32
    %c0_i32_5 = arith.constant 0 : i32
    %10 = arith.cmpi ne, %9, %c0_i32_5 : i32
    scf.if %10 {
      %cst_12 = arith.constant 0.000000e+00 : f32
      %17 = vector.broadcast %cst_12 : f32 to vector<8x32xf32>
      %c0_13 = arith.constant 0 : index
      %c0_14 = arith.constant 0 : index
      %18 = vector.load %arg5[%c0_13, %c0_14] : memref<8x32xf32, #tpu.memory_space<vmem>>, vector<8x32xf32>
      tpu.vector_store %arg5[%c0_13, %c0_14], %17 {strides = array<i32>} : memref<8x32xf32, #tpu.memory_space<vmem>>, vector<8x32xf32>,
    } else {
    }
    %c0_6 = arith.constant 0 : index
    %c0_7 = arith.constant 0 : index
    %11 = vector.load %arg5[%c0_6, %c0_7] : memref<8x32xf32, #tpu.memory_space<vmem>>, vector<8x32xf32>
    %12 = arith.addf %11, %7 : vector<8x32xf32>
    %c0_8 = arith.constant 0 : index
    %c0_9 = arith.constant 0 : index
    %13 = vector.load %arg5[%c0_8, %c0_9] : memref<8x32xf32, #tpu.memory_space<vmem>>, vector<8x32xf32>
    tpu.vector_store %arg5[%c0_8, %c0_9], %12 {strides = array<i32>} : memref<8x32xf32, #tpu.memory_space<vmem>>, vector<8x32xf32>,
    %c0_i32_10 = arith.constant 0 : i32
    %14 = arith.cmpi eq, %arg1, %c0_i32_10 : i32
    %15 = arith.extui %14 : i1 to i32
    %c0_i32_11 = arith.constant 0 : i32
    %16 = arith.cmpi ne, %15, %c0_i32_11 : i32
    scf.if %16 {
      %cst_12 = arith.constant dense<0.000000e+00> : vector<16x16xf32>
      %17 = tpu.matmul %1, %1, %cst_12 {dimension_numbers = #tpu.dot_dimension_numbers<[1], [1], [0], [0], [0, 0, 1, 0], [], []>} : vector<16x32xf32>, vector<16x32xf32>, vector<16x16xf32> -> vector<16x16xf32>
      %c0_13 = arith.constant 0 : index
      %c0_14 = arith.constant 0 : index
      %18 = vector.load %arg4[%c0_13, %c0_14] : memref<16x16xf32, #tpu.memory_space<vmem>>, vector<16x16xf32>
      %19 = arith.subf %17, %18 : vector<16x16xf32>
      %20 = arith.mulf %19, %19 : vector<16x16xf32>
      %21 = vector.shape_cast %20 : vector<16x16xf32> to vector<1x16x16xf32>
      %cst_15 = arith.constant dense<0.000000e+00> : vector<1xf32>
      %22 = vector.multi_reduction <add>, %21, %cst_15 [1, 2] : vector<1x16x16xf32> to vector<1xf32>
      %23 = vector.shape_cast %22 : vector<1xf32> to vector<1x1x1xf32>
      %24 = vector.extract %23[0, 0, 0] : f32 from vector<1x1x1xf32>
      %25 = vector.broadcast %24 : f32 to vector<8x128xf32>
      %c0_16 = arith.constant 0 : index
      %c0_17 = arith.constant 0 : index
      %26 = vector.load %arg6[%c0_16, %c0_17] : memref<8x128xf32, #tpu.memory_space<vmem>>, vector<8x128xf32>
      tpu.vector_store %arg6[%c0_16, %c0_17], %25 {strides = array<i32>} : memref<8x128xf32, #tpu.memory_space<vmem>>, vector<8x128xf32>,
    } else {
    }
    return
  }
  func.func @transform_0(%arg0: i32, %arg1: i32) -> (i32, i32) {
    %c1_i32 = arith.constant 1 : i32
    %0 = arith.muli %arg0, %c1_i32 : i32
    %1 = arith.addi %0, %arg1 : i32
    %c0_i32 = arith.constant 0 : i32
    %c0_i32_0 = arith.constant 0 : i32
    return %1, %c0_i32 : i32, i32
  }
  func.func @transform_1(%arg0: i32, %arg1: i32) -> (i32, i32) {
    %c0_i32 = arith.constant 0 : i32
    %c0_i32_0 = arith.constant 0 : i32
    %c0_i32_1 = arith.constant 0 : i32
    return %c0_i32, %c0_i32_0 : i32, i32
  }
  func.func @transform_2(%arg0: i32, %arg1: i32) -> (i32, i32) {
    %c0_i32 = arith.constant 0 : i32
    %c0_i32_0 = arith.constant 0 : i32
    %c0_i32_1 = arith.constant 0 : i32
    return %c0_i32, %c0_i32_0 : i32, i32
  }
  func.func @transform_3(%arg0: i32, %arg1: i32) -> (i32, i32) {
    %c0_i32 = arith.constant 0 : i32
    %c0_i32_0 = arith.constant 0 : i32
    return %arg0, %c0_i32 : i32, i32
  }
  func.func @transform_4(%arg0: i32, %arg1: i32) -> (i32, i32) {
    %c0_i32 = arith.constant 0 : i32
    %c0_i32_0 = arith.constant 0 : i32
    return %arg0, %c0_i32 : i32, i32
  }
}

</mosaic_0001>

<llo_original>
// kernel: rsr_loss.1
$region0: #{rsr_loss.1}
  #allocation0 [shape = 'u32[]', space=smem, size = 0x4, offset = 0x4, fixed_abs, tag = 'smem constant byte address 0x4 - core index']
  #allocation1 [shape = 'u32[72,128]{1,0:T(1,128)}', space=vmem, size = 0x9000, scoped, tag = 'internal scratch']
  %s0 = inlined_call_operand.vmem [shape: f32[16,32], index: 0, kind: input, shape index: {}]
  %s1 = inlined_call_operand.vmem [shape: f32[16,32], index: 1, kind: input, shape index: {}]
  %s2 = inlined_call_operand.hbm [shape: f32[16,16], index: 2, kind: input, shape index: {}]
  %s3 = inlined_call_operand.vmem [shape: f32[16,32], index: 3, kind: output, shape index: {0}]
  %s4 = inlined_call_operand.vmem [shape: f32[16,128], index: 4, kind: output, shape index: {1}]
  %5 = xla_tuple %s3, %s4
  %s6 = sld [smem:[#allocation0]]
  $region65: #{rsr_loss.1} parent=0
    _
  %s8 = ssub.s32 1, %s6
  %s9 = scalar_select 0, %s8, %s6
  $region1: #{rsr_loss.1} parent=0
    #allocation2 [shape = 'u8[8192]{0}', space=vmem, size = 0x2000, scoped, tag = 'input window, operand 2, single buffered']
    #allocation3 [shape = 's32[2]{0}', space=sflag, size = 0x8, scoped, tag = 'scoped memory for rsr_loss.1']
    %10 = vsyncpa [#allocation3], 0
    loop: start=0, step=1, limit=4
    $region2: #{rsr_loss.1} parent=1 // loop_pre_header
      _
    $region3: #{rsr_loss.1} parent=1 // loop_header
      %s12 = sphi 0, %s16
      %p13 = scmp.ge.s32.totalorder %s12, 4
      %s19 = sphi 0, %s31
      %s20 = sphi 0, %s27
      %s21 = sphi 0, %s19
      %s22 = sphi 0, %s20
      %s23 = sphi 0, %s21
      %s24 = sphi 0, %s22
      %s36 = sphi 0, %s38
      %s39 = sphi 0, %s36
      %s40 = sphi 0, %s39
      %s56 = sphi 0, %s40
      %s60 = sphi 0, %s60
      %s62 = sphi 0, %s60
      %s63 = sphi 0, %s62
      %s77 = sphi 0, %s63
      %s81 = sphi 0, %s81
      %s83 = sphi 0, %s81
      %s84 = sphi 0, %s83
      %s98 = sphi 0, %s84
      %s104 = sphi 0, %s106
      %s107 = sphi 0, %s104
      %s108 = sphi 0, %s107
      %s124 = sphi 0, %s108
      %s130 = sphi 0, %s132
      %s133 = sphi 0, %s130
      %s134 = sphi 0, %s133
      %s150 = sphi 0, %s134
    $region4: #{rsr_loss.1} parent=1 // loop_header_branch
      %15 = sbr.rel (%p13) target = $region8
    $region5: #{rsr_loss.1} parent=1 // loop_body
      %s17 = ssub.s32 %s12, 1
      %s18 = ssub.s32 %s12, 2
      %s25 = sadd.s32 1, %s20
      %p26 = scmp.ge.s32.totalorder %s25, 1
      %s27 = scalar_select %p26, 0, %s25
      %s28 = sadd.s32 1, %s19
      %s29 = scalar_select %p26, %s28, %s19
      %p30 = scmp.ge.s32.totalorder %s29, 2
      %s31 = scalar_select %p30, 0, %s29
      %s32 = sadd.s32 %s19, %s20
      %s33 = sadd.s32 %s31, %s27
      %s34 = ssub.s32 %s32, %s33
      %p35 = scmp.eq.s32.totalorder %s34, 0
      %s37 = sadd.s32 %s36, 1
      %s38 = scalar_select %p35, %s36, %s37
      %p41 = pneg %p35
      %p42 = scmp.eq.s32.totalorder %s12, 1
      %p43 = por %p41, %p42
      %p44 = scmp.ne.s32.totalorder %s36, %s39
      %p45 = scmp.eq.s32.totalorder %s12, 0
      %p46 = por %p44, %p45
      %p47 = scmp.ne.s32.totalorder %s36, %s39
      %p48 = scmp.eq.s32.totalorder %s17, 1
      %p49 = por %p47, %p48
      %p50 = scmp.ne.s32.totalorder %s39, %s40
      %p51 = scmp.eq.s32.totalorder %s17, 0
      %p52 = por %p50, %p51
      %p53 = scmp.ne.s32.totalorder %s39, %s40
      %p54 = scmp.eq.s32.totalorder %s18, 1
      %p55 = por %p53, %p54
      %p57 = scmp.ne.s32.totalorder %s40, %s56
      %p58 = scmp.eq.s32.totalorder %s18, 0
      %p59 = por %p57, %p58
      %s61 = sadd.s32 %s60, 1
      %p64 = scmp.eq.s32.totalorder %s12, 1
      %p65 = scmp.ne.s32.totalorder %s60, %s62
      %p66 = scmp.eq.s32.totalorder %s12, 0
      %p67 = por %p65, %p66
      %p68 = scmp.ne.s32.totalorder %s60, %s62
      %p69 = scmp.eq.s32.totalorder %s17, 1
      %p70 = por %p68, %p69
      %p71 = scmp.ne.s32.totalorder %s62, %s63
      %p72 = scmp.eq.s32.totalorder %s17, 0
      %p73 = por %p71, %p72
      %p74 = scmp.ne.s32.totalorder %s62, %s63
      %p75 = scmp.eq.s32.totalorder %s18, 1
      %p76 = por %p74, %p75
      %p78 = scmp.ne.s32.totalorder %s63, %s77
      %p79 = scmp.eq.s32.totalorder %s18, 0
      %p80 = por %p78, %p79
      %s82 = sadd.s32 %s81, 1
      %p85 = scmp.eq.s32.totalorder %s12, 1
      %p86 = scmp.ne.s32.totalorder %s81, %s83
      %p87 = scmp.eq.s32.totalorder %s12, 0
      %p88 = por %p86, %p87
      %p89 = scmp.ne.s32.totalorder %s81, %s83
      %p90 = scmp.eq.s32.totalorder %s17, 1
      %p91 = por %p89, %p90
      %p92 = scmp.ne.s32.totalorder %s83, %s84
      %p93 = scmp.eq.s32.totalorder %s17, 0
      %p94 = por %p92, %p93
      %p95 = scmp.ne.s32.totalorder %s83, %s84
      %p96 = scmp.eq.s32.totalorder %s18, 1
      %p97 = por %p95, %p96
      %p99 = scmp.ne.s32.totalorder %s84, %s98
      %p100 = scmp.eq.s32.totalorder %s18, 0
      %p101 = por %p99, %p100
      %s102 = ssub.s32 %s19, %s31
      %p103 = scmp.eq.s32.totalorder %s102, 0
      %s105 = sadd.s32 %s104, 1
      %s106 = scalar_select %p103, %s104, %s105
      %p109 = pneg %p103
      %p110 = scmp.eq.s32.totalorder %s12, 1
      %p111 = por %p109, %p110
      %p112 = scmp.ne.s32.totalorder %s104, %s107
      %p113 = scmp.eq.s32.totalorder %s12, 0
      %p114 = por %p112, %p113
      %p115 = scmp.ne.s32.totalorder %s104, %s107
      %p116 = scmp.eq.s32.totalorder %s17, 1
      %p117 = por %p115, %p116
      %p118 = scmp.ne.s32.totalorder %s107, %s108
      %p119 = scmp.eq.s32.totalorder %s17, 0
      %p120 = por %p118, %p119
      %p121 = scmp.ne.s32.totalorder %s107, %s108
      %p122 = scmp.eq.s32.totalorder %s18, 1
      %p123 = por %p121, %p122
      %p125 = scmp.ne.s32.totalorder %s108, %s124
      %p126 = scmp.eq.s32.totalorder %s18, 0
      %p127 = por %p125, %p126
      %s128 = ssub.s32 %s19, %s31
      %p129 = scmp.eq.s32.totalorder %s128, 0
      %s131 = sadd.s32 %s130, 1
      %s132 = scalar_select %p129, %s130, %s131
      %p135 = pneg %p129
      %p136 = scmp.eq.s32.totalorder %s12, 1
      %p137 = por %p135, %p136
      %p138 = scmp.ne.s32.totalorder %s130, %s133
      %p139 = scmp.eq.s32.totalorder %s12, 0
      %p140 = por %p138, %p139
      %p141 = scmp.ne.s32.totalorder %s130, %s133
      %p142 = scmp.eq.s32.totalorder %s17, 1
      %p143 = por %p141, %p142
      %p144 = scmp.ne.s32.totalorder %s133, %s134
      %p145 = scmp.eq.s32.totalorder %s17, 0
      %p146 = por %p144, %p145
      %p147 = scmp.ne.s32.totalorder %s133, %s134
      %p148 = scmp.eq.s32.totalorder %s18, 1
      %p149 = por %p147, %p148
      %p151 = scmp.ne.s32.totalorder %s134, %s150
      %p152 = scmp.eq.s32.totalorder %s18, 0
      %p153 = por %p151, %p152
      %p154 = scmp.le.s32.totalorder 1, %s12
      %p155 = scmp.lt.s32.totalorder %s12, 3
      %p156 = pnand %p154, %p155
      %p157 = pneg %p156
      // Predicated region
      $region9: #{rsr_loss.1} parent=5 // pred_check
        _
      $region10: #{rsr_loss.1} parent=5 // pred_check_branch
        %159 = sbr.rel (%p156) target = $region12
      $region11: #{rsr_loss.1} parent=5 // pred_region
        %s160 = ssub.s32 %s12, 1
        // Predicated region
        $region13: #{rsr_loss.1} parent=11 // pred_check
          %p161 = pneg %p73
        $region14: #{rsr_loss.1} parent=11 // pred_check_branch
          %163 = sbr.rel (%p161) target = $region16
        $region15: #{rsr_loss.1} parent=11 // pred_region
          _
        $region16: #{rsr_loss.1} parent=11 // pred_fallthru
          _
        // Predicated region
        $region17: #{rsr_loss.1} parent=11 // pred_check
          %p164 = pneg %p94
        $region18: #{rsr_loss.1} parent=11 // pred_check_branch
          %166 = sbr.rel (%p164) target = $region20
        $region19: #{rsr_loss.1} parent=11 // pred_region
          %168 = vsyncadd [#allocation3], 0
          %s169 = sshll.u32 %s2, 4
          %s170 = int_to_ptr.hbm [resolvable:$true] %s169
          %s171 = sshll.u32 [#allocation2], 4
          %s172 = int_to_ptr.vmem [resolvable:$true] %s171
          %177 = dma.hbm_to_vmem [thread:$0]  %s170, 256, %s172, [#allocation3], 128, 128, 8
        $region20: #{rsr_loss.1} parent=11 // pred_fallthru
          _
      $region12: #{rsr_loss.1} parent=5 // pred_fallthru
        _
      %p178 = scmp.lt.s32.totalorder %s12, 2
      // Predicated region
      $region21: #{rsr_loss.1} parent=5 // pred_check
        %p179 = pneg %p178
      $region22: #{rsr_loss.1} parent=5 // pred_check_branch
        %181 = sbr.rel (%p179) target = $region24
      $region23: #{rsr_loss.1} parent=5 // pred_region
        // Predicated region
        $region25: #{rsr_loss.1} parent=23 // pred_check
          %p182 = pneg %p46
        $region26: #{rsr_loss.1} parent=23 // pred_check_branch
          %184 = sbr.rel (%p182) target = $region28
        $region27: #{rsr_loss.1} parent=23 // pred_region
          %s185 = sadd.s32 %s19, %s20
          %p186 = scmp.lt.s32.totalorder %s185, 1
          %s187 = scalar_select %p186, %s185, 1
          %s188 = smul.addr %s187, 8
          %s189 = scalar_lea.vmem %s0, %s188
          %s190 = sadd.s32 %s19, %s20
        $region28: #{rsr_loss.1} parent=23 // pred_fallthru
          _
      $region24: #{rsr_loss.1} parent=5 // pred_fallthru
        _
      %p191 = scmp.le.s32.totalorder 1, %s12
      %p192 = scmp.lt.s32.totalorder %s12, 3
      %p193 = pnand %p191, %p192
      %p194 = pneg %p193
      // Predicated region
      $region29: #{rsr_loss.1} parent=5 // pred_check
        _
      $region30: #{rsr_loss.1} parent=5 // pred_check_branch
        %196 = sbr.rel (%p193) target = $region32
      $region31: #{rsr_loss.1} parent=5 // pred_region
        %s197 = ssub.s32 %s12, 1
        // Predicated region
        $region33: #{rsr_loss.1} parent=31 // pred_check
          %p198 = pneg %p94
        $region34: #{rsr_loss.1} parent=31 // pred_check_branch
          %200 = sbr.rel (%p198) target = $region36
        $region35: #{rsr_loss.1} parent=31 // pred_region
          %202 = dma.done [#allocation3], 256
        $region36: #{rsr_loss.1} parent=31 // pred_fallthru
          _
        %s203 = sadd.s32 %s21, %s22
        %p204 = scmp.lt.s32.totalorder %s203, 1
        %s205 = scalar_select %p204, %s203, 1
        %s206 = smul.addr %s205, 8
        %s207 = scalar_lea.vmem %s0, %s206
        %p208 = pneg %p52
        %p209 = pneg %p49
        %p210 = pneg %p73
        %p211 = pneg %p70
        %p212 = pneg %p94
        %p213 = pneg %p91
        %p214 = pneg %p120
        %p215 = pneg %p117
        %p216 = scmp.lt.s32.totalorder %s21, 1
        %s217 = scalar_select %p216, %s21, 1
        %s218 = smul.addr %s217, 8
        %s219 = scalar_lea.vmem %s3, %s218
        %p220 = pneg %p146
        %p221 = pneg %p143
        %p222 = scmp.lt.s32.totalorder %s21, 1
        %s223 = scalar_select %p222, %s21, 1
        %s224 = smul.addr %s223, 8
        %s225 = scalar_lea.vmem %s4, %s224
        %s226 = sadd.s32 %s21, %s22
        %p227 = scmp.lt.s32.totalorder %s226, 1
        %s228 = scalar_select %p227, %s226, 1
        %s229 = smul.addr %s228, 8
        %s230 = scalar_lea.vmem %s0, %s229
        %s231 = sadd.s32 %s21, %s22
        %p232 = scmp.lt.s32.totalorder %s21, 1
        %s233 = scalar_select %p232, %s21, 1
        %s234 = smul.addr %s233, 8
        %s235 = scalar_lea.vmem %s3, %s234
        %p236 = scmp.lt.s32.totalorder %s21, 1
        %s237 = scalar_select %p236, %s21, 1
        %s238 = smul.addr %s237, 8
        %s239 = scalar_lea.vmem %s4, %s238
        %v240 = vld [vmem:[%s230] sm:$0xff]
        %v241 = vld [vmem:[%s1] sm:$0xff]
        %v242 = vld [vmem:[%s1 + $0x8] sm:$0xff]
        %vm243 = vcmask 261120
        %v245 = vsel %vm243, %v240, 0
        %v248 = vsel %vm243, %v241, 0
        %v251 = vsel %vm243, %v242, 0
        %253 = vmatpush.xpose.msra.mxu0 0.0
        %254 = vmatpush.xpose.msra.mxu0 0.0
        %255 = vmatpush.xpose.msra.mxu0 0.0
        %256 = vmatpush.xpose.msra.mxu0 0.0
        %257 = vmatpush.xpose.msra.mxu0 0.0
        %258 = vmatpush.xpose.msra.mxu0 0.0
        %259 = vmatpush.xpose.msra.mxu0 0.0
        %260 = vmatpush.xpose.msra.mxu0 0.0
        %261 = vmatpush.xpose.msra.mxu0 0.0
        %262 = vmatpush.xpose.msra.mxu0 0.0
        %263 = vmatpush.xpose.msra.mxu0 0.0
        %264 = vmatpush.xpose.msra.mxu0 0.0
        %265 = vmatpush.xpose.msra.mxu0 0.0
        %266 = vmatpush.xpose.msra.mxu0 0.0
        %267 = vmatpush.xpose.msra.mxu0 %v251
        %268 = vmatpush.xpose.msra.mxu0 %v248
        %269 = vmatmul.f32.gmra.mxu0 %v245
        %v270 = vpop.f32.mrf.mxu0
        %v271 = vadd.f32 0.0, %v270
        %272 = vdwg.mxu0
        %vm273 = vcmask 130048
        %v275 = vsel %vm273, %v271, 0
        %277 = vmatpush.msra.mxu0 0.0
        %278 = vmatpush.msra.mxu0 0.0
        %279 = vmatpush.msra.mxu0 0.0
        %280 = vmatpush.msra.mxu0 0.0
        %281 = vmatpush.msra.mxu0 0.0
        %282 = vmatpush.msra.mxu0 0.0
        %283 = vmatpush.msra.mxu0 0.0
        %284 = vmatpush.msra.mxu0 0.0
        %285 = vmatpush.msra.mxu0 0.0
        %286 = vmatpush.msra.mxu0 0.0
        %287 = vmatpush.msra.mxu0 0.0
        %288 = vmatpush.msra.mxu0 0.0
        %289 = vmatpush.msra.mxu0 0.0
        %290 = vmatpush.msra.mxu0 0.0
        %291 = vmatpush.msra.mxu0 %v242
        %292 = vmatpush.msra.mxu0 %v241
        %293 = vmatmul.f32.gmra.mxu0 %v275
        %v294 = vpop.f32.mrf.mxu0
        %v295 = vadd.f32 0.0, %v294
        %296 = vdwg.mxu0
        %v297 = vsub.f32 %v240, %v295
        %v298 = vmul.f32 %v297, %v297
        %v299 = vadd.f32 %v298, 0.0
        %p300 = scmp.eq.s32.totalorder %s22, 0
        // Predicated region
        $region37: #{rsr_loss.1} parent=31 // pred_check
          %p301 = pneg %p300
        $region38: #{rsr_loss.1} parent=31 // pred_check_branch
          %303 = sbr.rel (%p301) target = $region40
        $region39: #{rsr_loss.1} parent=31 // pred_region
          %304 = vst.msk [vmem:[%s235] sm:$0xff] %vm243, 0.0
        $region40: #{rsr_loss.1} parent=31 // pred_fallthru
          _
        %v305 = vld [vmem:[%s235] sm:$0xff]
        %v306 = vadd.f32 %v305, %v299
        %307 = vst.msk [vmem:[%s235] sm:$0xff] %vm243, %v306
        // Predicated region
        $region41: #{rsr_loss.1} parent=31 // pred_check
          %p308 = pneg %p300
        $region42: #{rsr_loss.1} parent=31 // pred_check_branch
          %310 = sbr.rel (%p308) target = $region44
        $region43: #{rsr_loss.1} parent=31 // pred_region
          %311 = vmatpush.xpose.msra.mxu0 0.0
          %312 = vmatpush.xpose.msra.mxu0 0.0
          %313 = vmatpush.xpose.msra.mxu0 0.0
          %314 = vmatpush.xpose.msra.mxu0 0.0
          %315 = vmatpush.xpose.msra.mxu0 0.0
          %316 = vmatpush.xpose.msra.mxu0 0.0
          %317 = vmatpush.xpose.msra.mxu0 0.0
          %318 = vmatpush.xpose.msra.mxu0 0.0
          %319 = vmatpush.xpose.msra.mxu0 0.0
          %320 = vmatpush.xpose.msra.mxu0 0.0
          %321 = vmatpush.xpose.msra.mxu0 0.0
          %322 = vmatpush.xpose.msra.mxu0 0.0
          %323 = vmatpush.xpose.msra.mxu0 0.0
          %324 = vmatpush.xpose.msra.mxu0 0.0
          %325 = vmatpush.xpose.msra.mxu0 %v251
          %326 = vmatpush.xpose.msra.mxu0 %v248
          %327 = vmatmul.f32.gmra.mxu0 %v248
          %v328 = vpop.f32.mrf.mxu0
          %v329 = vadd.f32 0.0, %v328
          %330 = vmatmul.f32.gmra.mxu0 %v251
          %v331 = vpop.f32.mrf.mxu0
          %v332 = vadd.f32 0.0, %v331
          %333 = vdwg.mxu0
          %v334 = vld [vmem:[#allocation2] sm:$0xff]
          %v335 = vld [vmem:[#allocation2 + $0x8] sm:$0xff]
          %v336 = vsub.f32 %v329, %v334
          %v337 = vsub.f32 %v332, %v335
          %v338 = vmul.f32 %v336, %v336
          %v339 = vmul.f32 %v337, %v337
          %v340 = vsel %vm273, %v338, 0.0
          %v341 = vsel %vm273, %v339, 0.0
          %v342 = vadd.f32 %v340, %v341
          %343 = vadd.xlane.f32.xlu0 %v342
          %v344 = vpop.xlane.xlu0 %343
          %v345 = vrot.slane %v344, 4
          %v346 = vadd.f32 %v344, %v345
          %v347 = vrot.slane %v346, 2
          %v348 = vadd.f32 %v346, %v347
          %v349 = vrot.slane %v348, 1
          %v350 = vadd.f32 %v348, %v349
          %s351 = vtos %v350
          %v352 = vstv %s351
          %353 = vst [vmem:[%s239] sm:$0xff] %v352
        $region44: #{rsr_loss.1} parent=31 // pred_fallthru
          _
        %p354 = scmp.lt.s32.totalorder %s21, 1
        %s355 = scalar_select %p354, %s21, 1
        %s356 = smul.addr %s355, 8
        %s357 = scalar_lea.vmem %s3, %s356
        %p358 = scmp.lt.s32.totalorder %s21, 1
        %s359 = scalar_select %p358, %s21, 1
        %s360 = smul.addr %s359, 8
        %s361 = scalar_lea.vmem %s4, %s360
        // Predicated region
        $region45: #{rsr_loss.1} parent=31 // pred_check
          %p362 = pneg %p117
        $region46: #{rsr_loss.1} parent=31 // pred_check_branch
          %364 = sbr.rel (%p362) target = $region48
        $region47: #{rsr_loss.1} parent=31 // pred_region
          _
        $region48: #{rsr_loss.1} parent=31 // pred_fallthru
          _
        // Predicated region
        $region49: #{rsr_loss.1} parent=31 // pred_check
          %p365 = pneg %p143
        $region50: #{rsr_loss.1} parent=31 // pred_check_branch
          %367 = sbr.rel (%p365) target = $region52
        $region51: #{rsr_loss.1} parent=31 // pred_region
          _
        $region52: #{rsr_loss.1} parent=31 // pred_fallthru
          _
      $region32: #{rsr_loss.1} parent=5 // pred_fallthru
        _
      %p368 = scmp.le.s32.totalorder 2, %s12
      // Predicated region
      $region53: #{rsr_loss.1} parent=5 // pred_check
        %p369 = pneg %p368
      $region54: #{rsr_loss.1} parent=5 // pred_check_branch
        %371 = sbr.rel (%p369) target = $region56
      $region55: #{rsr_loss.1} parent=5 // pred_region
        %s372 = ssub.s32 %s12, 2
        // Predicated region
        $region57: #{rsr_loss.1} parent=55 // pred_check
          %p373 = pneg %p123
        $region58: #{rsr_loss.1} parent=55 // pred_check_branch
          %375 = sbr.rel (%p373) target = $region60
        $region59: #{rsr_loss.1} parent=55 // pred_region
          %p376 = scmp.lt.s32.totalorder %s23, 1
          %s377 = scalar_select %p376, %s23, 1
          %s378 = smul.addr %s377, 8
          %s379 = scalar_lea.vmem %s3, %s378
        $region60: #{rsr_loss.1} parent=55 // pred_fallthru
          _
        // Predicated region
        $region61: #{rsr_loss.1} parent=55 // pred_check
          %p380 = pneg %p149
        $region62: #{rsr_loss.1} parent=55 // pred_check_branch
          %382 = sbr.rel (%p380) target = $region64
        $region63: #{rsr_loss.1} parent=55 // pred_region
          %p383 = scmp.lt.s32.totalorder %s23, 1
          %s384 = scalar_select %p383, %s23, 1
          %s385 = smul.addr %s384, 8
          %s386 = scalar_lea.vmem %s4, %s385
        $region64: #{rsr_loss.1} parent=55 // pred_fallthru
          _
      $region56: #{rsr_loss.1} parent=5 // pred_fallthru
        _
    $region6: #{rsr_loss.1} parent=1 // loop_footer
      %s16 = sadd.s32 1, %s12
    $region7: #{rsr_loss.1} parent=1 // loop_footer_branch
      %11 = sbr.rel target = $region3
    $region8: #{rsr_loss.1} parent=1 // loop_exit
      _
    %387 = vsyncpa [#allocation3], 1
    %s388 = scalar_lea.sflag [#allocation3], 1
    %389 = vsyncpa %s388, 1

</llo_original>
